<compile_context>
chip_gen: v7x
topology: tpu7x:2x2x1
jax: 0.10.0
libtpu: 0.0.40
codegen_flags: <defaults>
</compile_context>

<pallas_src>
import functools

import jax
import jax.numpy as jnp
from jax.experimental import pallas as pl
from jax.experimental.pallas import tpu as pltpu


# -----------------------------------------------------------------------------
# Hardware-aware sizing helpers
# -----------------------------------------------------------------------------

def _vmem_capacity_bytes():
    """Physical VMEM per TensorCore; conservative 64 MiB (v7x) fallback."""
    try:
        info = pltpu.get_tpu_info()
        cap = int(getattr(info, "vmem_capacity_bytes", 0) or 0)
        if cap > 0:
            return cap
    except Exception:
        pass
    return 64 * 1024 * 1024


def _sublane_multiple(dtype):
    """Min second-to-last tile dim: 8 (f32), 16 (bf16), 32 (int8/fp8)."""
    itemsize = jnp.dtype(dtype).itemsize
    return max(8, 32 // max(1, itemsize))


def _choose_batch_tile(batch, rows_budget, sub):
    """Largest batch tile <= rows_budget that is a multiple of `sub`,
    preferring one that divides `batch` evenly (avoids a ragged last chunk)."""
    t = max(sub, (rows_budget // sub) * sub)
    lo = max(sub, t - 64 * sub)          # bounded search at trace time
    for cand in range(t, lo - 1, -sub):
        if batch % cand == 0:
            return cand
    return t


# -----------------------------------------------------------------------------
# Primary path: manual single-buffer writeback (fill once, DMA many times)
# -----------------------------------------------------------------------------

def _manual_writeback_kernel(const_ref, out_hbm_ref, fill_ref, sems, *,
                             tb, rem, nslots, num_steps):
    # const_ref:   (1, F)   VMEM (constant index_map -> fetched once)
    # out_hbm_ref: (B, F)   HBM (memory_space=pl.ANY) -- written only via DMA
    # fill_ref:    (TB, F)  VMEM staging tile, filled exactly once
    # sems:        (nslots,) rotating DMA-completion semaphores
    i = pl.program_id(0)

    # Fill the staging tile once.  Its contents are identical for every batch
    # chunk, so re-broadcasting per step (what auto-pipelined out_specs would
    # force) is pure wasted VPU/vst work.
    @pl.when(i == 0)
    def _():
        fill_ref[...] = jnp.broadcast_to(const_ref[...], fill_ref.shape)

    slot = i % nslots

    # Before re-using this semaphore slot, retire the copy issued `nslots`
    # steps ago.  That older copy is always a full tile: only the last step
    # can be ragged, and the last step's copy is drained below, never here.
    @pl.when(i >= nslots)
    def _():
        pltpu.make_async_copy(
            fill_ref, out_hbm_ref.at[pl.ds(0, tb)], sems.at[slot]).wait()

    start = pl.multiple_of(i * tb, tb)
    if rem == 0:
        pltpu.make_async_copy(
            fill_ref, out_hbm_ref.at[pl.ds(start, tb)], sems.at[slot]).start()
    else:
        @pl.when(i < num_steps - 1)
        def _():
            pltpu.make_async_copy(
                fill_ref, out_hbm_ref.at[pl.ds(start, tb)],
                sems.at[slot]).start()

        @pl.when(i == num_steps - 1)
        def _():
            pltpu.make_async_copy(
                fill_ref.at[pl.ds(0, rem)],
                out_hbm_ref.at[pl.ds(start, rem)],
                sems.at[slot]).start()

    # Last step: drain every still-outstanding copy (the trailing
    # min(num_steps, nslots) steps, each on a distinct slot).
    @pl.when(i == num_steps - 1)
    def _():
        for j in range(max(0, num_steps - nslots), num_steps):
            rows = rem if (rem != 0 and j == num_steps - 1) else tb
            pltpu.make_async_copy(
                fill_ref.at[pl.ds(0, rows)],
                out_hbm_ref.at[pl.ds(0, rows)],
                sems.at[j % nslots]).wait()


def _constant_input_manual(const_flat, batch, f, dtype, rows_budget, sub,
                           vmem_limit_bytes):
    itemsize = jnp.dtype(dtype).itemsize
    if batch <= rows_budget:
        tb = batch                              # single grid step
    else:
        tb = _choose_batch_tile(batch, rows_budget, sub)

    num_steps = pl.cdiv(batch, tb)
    rem = batch % tb
    nslots = int(min(3, num_steps))             # up to 3 outstanding DMAs

    kernel = functools.partial(
        _manual_writeback_kernel,
        tb=tb, rem=rem, nslots=nslots, num_steps=num_steps)

    return pl.pallas_call(
        kernel,
        out_shape=jax.ShapeDtypeStruct((batch, f), dtype),
        grid_spec=pltpu.PrefetchScalarGridSpec(
            num_scalar_prefetch=0,
            grid=(num_steps,),
            in_specs=[
                # Constant block index -> stays VMEM-resident, not re-DMA'd.
                pl.BlockSpec((1, f), lambda i: (0, 0)),
            ],
            out_specs=pl.BlockSpec(memory_space=pl.ANY),
            scratch_shapes=[
                pltpu.VMEM((tb, f), dtype),
                pltpu.SemaphoreType.DMA((nslots,)),
            ],
        ),
        compiler_params=pltpu.CompilerParams(
            # The grid carries a dependency (fill at step 0, rotating sem
            # slots), so it must stay sequential/"arbitrary".
            # TODO(synk): a v7x dual-TC (CORE_PARALLEL) variant needs a
            # per-core fill of the staging tile; not done here.
            dimension_semantics=("arbitrary",),
            vmem_limit_bytes=vmem_limit_bytes,
        ),
        cost_estimate=pl.CostEstimate(
            flops=0, transcendentals=0,
            bytes_accessed=(batch * f + f) * itemsize),
    )(const_flat)


# -----------------------------------------------------------------------------
# Fallback path: auto-pipelined, tiled over batch AND feature (large C*S*S)
# -----------------------------------------------------------------------------

def _broadcast_tile_kernel(const_ref, out_ref):
    out_ref[...] = jnp.broadcast_to(const_ref[...], out_ref.shape)


def _constant_input_tiled(const_flat, batch, f, dtype, tile_budget, sub,
                          vmem_limit_bytes):
    itemsize = jnp.dtype(dtype).itemsize
    # Lane-dense feature tile (multiple of 128), sized so a `sub`-row output
    # buffer stays within the per-buffer budget (output is double-buffered).
    tf = min(f, max(128, ((tile_budget // (sub * itemsize)) // 128) * 128))
    rows = max(sub, ((tile_budget // (tf * itemsize)) // sub) * sub)
    tb = batch if batch <= rows else rows
    grid = (pl.cdiv(batch, tb), pl.cdiv(f, tf))

    return pl.pallas_call(
        _broadcast_tile_kernel,
        out_shape=jax.ShapeDtypeStruct((batch, f), dtype),
        grid_spec=pltpu.PrefetchScalarGridSpec(
            num_scalar_prefetch=0,
            grid=grid,
            in_specs=[pl.BlockSpec((1, tf), lambda i, j: (0, j))],
            out_specs=pl.BlockSpec((tb, tf), lambda i, j: (i, j)),
        ),
        compiler_params=pltpu.CompilerParams(
            dimension_semantics=("parallel", "arbitrary"),
            vmem_limit_bytes=vmem_limit_bytes,
        ),
        cost_estimate=pl.CostEstimate(
            flops=0, transcendentals=0,
            bytes_accessed=(batch * f + f) * itemsize),
    )(const_flat)


# -----------------------------------------------------------------------------
# Public forward
# -----------------------------------------------------------------------------

def constant_input_forward(const_param, batch, *, max_tile_bytes=None):
    """Repeat const_param (1, C, S, S) along batch -> (batch, C, S, S)."""
    one, c, s1, s2 = const_param.shape
    assert one == 1, const_param.shape
    f = c * s1 * s2
    dtype = const_param.dtype
    itemsize = jnp.dtype(dtype).itemsize
    sub = _sublane_multiple(dtype)

    const_flat = const_param.reshape(1, f)       # lane-dense flattening

    vmem_cap = _vmem_capacity_bytes()
    if max_tile_bytes is None:
        # Generation-aware: <= half of physical VMEM per TC, capped at 48 MiB
        # (v7x: 64 MiB/TC -> 32 MiB tile; v5e/v6e: 128 MiB -> 48 MiB tile).
        max_tile_bytes = min(vmem_cap // 2, 48 * 1024 * 1024)
    # Explicit scoped-VMEM limit so the bigger tiles actually compile
    # (defaults are only 16 MiB on v5e / 32 MiB on v6e & v7x).
    vmem_limit_bytes = int(min(vmem_cap - (4 << 20),
                               max(32 << 20, max_tile_bytes + (16 << 20))))

    rows_budget = max_tile_bytes // max(1, f * itemsize)
    if batch <= rows_budget or rows_budget >= sub:
        out_flat = _constant_input_manual(
            const_flat, batch, f, dtype, rows_budget, sub, vmem_limit_bytes)
    else:
        # A sublane-rounded batch tile would blow the budget -> tile F too.
        out_flat = _constant_input_tiled(
            const_flat, batch, f, dtype, max_tile_bytes, sub, vmem_limit_bytes)

    return out_flat.reshape(batch, c, s1, s2)


class ConstantInput:
    """JAX mirror of the PyTorch ConstantInput module."""

    # Below ~1 MiB of output, skip Pallas: jnp.broadcast_to typically fuses
    # into the consumer, eliminating the materialized B*C*S*S write entirely.
    _PALLAS_MIN_BYTES = 1 << 20

    def __init__(self, channel, size=4, key=None):
        if key is None:
            key = jax.random.PRNGKey(0)
        # nn.Parameter(torch.randn(1, channel, size, size)) -> standard normal
        self.input = jax.random.normal(
            key, (1, channel, size, size), dtype=jnp.float32)

    def __call__(self, x):
        batch = x.shape[0]
        _, c, s1, s2 = self.input.shape
        out_bytes = batch * c * s1 * s2 * jnp.dtype(self.input.dtype).itemsize
        if out_bytes < self._PALLAS_MIN_BYTES:
            return jnp.broadcast_to(self.input, (batch, c, s1, s2))
        return constant_input_forward(self.input, batch)


if __name__ == "__main__":
    key = jax.random.PRNGKey(0)
    k_param, k_x = jax.random.split(key)

    batch, channel, size = 2, 4, 4
    module = ConstantInput(channel, size=size, key=k_param)

    # forward() only reads x.shape[0]; values are irrelevant (as in PyTorch).
    x = jax.random.normal(k_x, (batch, channel, 16, 16), dtype=jnp.float32)
    ref = jnp.broadcast_to(module.input, (batch, channel, size, size))

    # 1) Pallas manual-writeback path (single grid step at this tiny size).
    out_pallas = jax.block_until_ready(constant_input_forward(module.input, batch))
    assert out_pallas.shape == (batch, channel, size, size), out_pallas.shape
    assert jnp.allclose(out_pallas, ref), "Pallas output mismatch vs reference"

    # 2) Module forward (fusable broadcast fast path at this tiny size).
    out_module = jax.block_until_ready(module(x))
    assert out_module.shape == (batch, channel, size, size), out_module.shape
    assert jnp.allclose(out_module, ref), "Module output mismatch vs reference"

    # 3) Multi-step manual path: ragged final chunk + semaphore-slot reuse
    #    (tiny forced tile budget -> tb=8 rows, 5 grid steps, rem=4).
    b2, c2 = 36, 8
    p2 = jax.random.normal(k_param, (1, c2, 4, 4), dtype=jnp.float32)
    ref2 = jnp.broadcast_to(p2, (b2, c2, 4, 4))
    out2 = jax.block_until_ready(
        constant_input_forward(p2, b2, max_tile_bytes=4096))
    assert jnp.allclose(out2, ref2), "Multi-step manual path mismatch"

    # 4) Large-F fallback path (feature axis tiled, lane-dense 128-multiples).
    b3, c3 = 4, 512
    p3 = jax.random.normal(k_x, (1, c3, 4, 4), dtype=jnp.float32)
    ref3 = jnp.broadcast_to(p3, (b3, c3, 4, 4))
    out3 = jax.block_until_ready(
        constant_input_forward(p3, b3, max_tile_bytes=16 * 1024))
    assert jnp.allclose(out3, ref3), "Tiled fallback path mismatch"

    print("KERNEL_OK")
</pallas_src>

<mosaic_0001>
module attributes {stable_mosaic.version = 11 : i64} {
  func.func @_manual_writeback_kernel(%arg0: i32, %arg1: memref<1x64xf32, #tpu.memory_space<vmem>>, %arg2: memref<2x64xf32, #tpu.memory_space<any>>, %arg3: memref<2x64xf32, #tpu.memory_space<vmem>>, %arg4: memref<1x!tpu.dma_semaphore, #tpu.memory_space<semaphore_mem>>) attributes {dimension_semantics = [#tpu.dimension_semantics<arbitrary>], iteration_bounds = array<i64: 1>, scalar_prefetch = 0 : i64, scratch_operands = 2 : i64, tpu.core_type = #tpu.core_type<tc>, window_params = [{pipeline_mode = #tpu.pipeline_mode<synchronous>, transform_indices = @transform_0, window_bounds = array<i64: 1, 64>}, {}]} {
    %c0_i32 = arith.constant 0 : i32
    %0 = arith.cmpi eq, %arg0, %c0_i32 : i32
    %1 = arith.extui %0 : i1 to i32
    %c0_i32_0 = arith.constant 0 : i32
    %2 = arith.cmpi ne, %1, %c0_i32_0 : i32
    scf.if %2 {
      %c0 = arith.constant 0 : index
      %c0_11 = arith.constant 0 : index
      %24 = vector.load %arg1[%c0, %c0_11] : memref<1x64xf32, #tpu.memory_space<vmem>>, vector<1x64xf32>
      %25 = vector.shape_cast %24 : vector<1x64xf32> to vector<1x64xf32>
      %26 = vector.broadcast %25 : vector<1x64xf32> to vector<2x64xf32>
      %c0_12 = arith.constant 0 : index
      %c0_13 = arith.constant 0 : index
      %27 = vector.load %arg3[%c0_12, %c0_13] : memref<2x64xf32, #tpu.memory_space<vmem>>, vector<2x64xf32>
      tpu.vector_store %arg3[%c0_12, %c0_13], %26 {strides = array<i32>} : memref<2x64xf32, #tpu.memory_space<vmem>>, vector<2x64xf32>,
    } else {
    }
    %c1_i32 = arith.constant 1 : i32
    %c0_i32_1 = arith.constant 0 : i32
    %3 = arith.cmpi eq, %c1_i32, %c0_i32_1 : i32
    %c1_i32_2 = arith.constant 1 : i32
    %4 = arith.select %3, %c1_i32_2, %c1_i32 : i32
    %5 = arith.remsi %arg0, %4 : i32
    %c0_i32_3 = arith.constant 0 : i32
    %6 = arith.cmpi ne, %5, %c0_i32_3 : i32
    %c0_i32_4 = arith.constant 0 : i32
    %7 = arith.cmpi slt, %5, %c0_i32_4 : i32
    %c0_i32_5 = arith.constant 0 : i32
    %8 = arith.cmpi slt, %4, %c0_i32_5 : i32
    %9 = arith.xori %7, %8 : i1
    %10 = arith.andi %9, %6 : i1
    %11 = arith.addi %5, %4 : i32
    %12 = arith.select %10, %11, %5 : i32
    %c1_i32_6 = arith.constant 1 : i32
    %13 = arith.cmpi sge, %arg0, %c1_i32_6 : i32
    %14 = arith.extui %13 : i1 to i32
    %c0_i32_7 = arith.constant 0 : i32
    %15 = arith.cmpi ne, %14, %c0_i32_7 : i32
    scf.if %15 {
      %c0_i32_11 = arith.constant 0 : i32
      %c0_i32_12 = arith.constant 0 : i32
      %24 = tpu.memref_slice %arg2[%c0_i32_11, %c0_i32_12] : memref<2x64xf32, #tpu.memory_space<any>> -> memref<2x64xf32, #tpu.memory_space<any>>
      %25 = tpu.memref_slice %arg4[%12] : memref<1x!tpu.dma_semaphore, #tpu.memory_space<semaphore_mem>> -> memref<1x!tpu.dma_semaphore, #tpu.memory_space<semaphore_mem>>
      %26 = tpu.memref_squeeze %25 : memref<1x!tpu.dma_semaphore, #tpu.memory_space<semaphore_mem>> -> memref<!tpu.dma_semaphore, #tpu.memory_space<semaphore_mem>>
      tpu.wait_dma2 semaphore(%26 : memref<!tpu.dma_semaphore, #tpu.memory_space<semaphore_mem>>) src(%arg3 : memref<2x64xf32, #tpu.memory_space<vmem>>) dst(%24 : memref<2x64xf32, #tpu.memory_space<any>>)
    } else {
    }
    %c2_i32 = arith.constant 2 : i32
    %16 = arith.muli %arg0, %c2_i32 : i32
    %17 = tpu.assume_multiple %16, 2 : i32
    %c0_i32_8 = arith.constant 0 : i32
    %18 = tpu.memref_slice %arg2[%17, %c0_i32_8] : memref<2x64xf32, #tpu.memory_space<any>> -> memref<2x64xf32, #tpu.memory_space<any>>
    %19 = tpu.memref_slice %arg4[%12] : memref<1x!tpu.dma_semaphore, #tpu.memory_space<semaphore_mem>> -> memref<1x!tpu.dma_semaphore, #tpu.memory_space<semaphore_mem>>
    %20 = tpu.memref_squeeze %19 : memref<1x!tpu.dma_semaphore, #tpu.memory_space<semaphore_mem>> -> memref<!tpu.dma_semaphore, #tpu.memory_space<semaphore_mem>>
    tpu.enqueue_dma source(%arg3 : memref<2x64xf32, #tpu.memory_space<vmem>>) target(%18 : memref<2x64xf32, #tpu.memory_space<any>>) target_semaphore(%20 : memref<!tpu.dma_semaphore, #tpu.memory_space<semaphore_mem>>)
    %c0_i32_9 = arith.constant 0 : i32
    %21 = arith.cmpi eq, %arg0, %c0_i32_9 : i32
    %22 = arith.extui %21 : i1 to i32
    %c0_i32_10 = arith.constant 0 : i32
    %23 = arith.cmpi ne, %22, %c0_i32_10 : i32
    scf.if %23 {
      %c0_i32_11 = arith.constant 0 : i32
      %c0_i32_12 = arith.constant 0 : i32
      %c0_i32_13 = arith.constant 0 : i32
      %24 = tpu.memref_slice %arg3[%c0_i32_12, %c0_i32_13] : memref<2x64xf32, #tpu.memory_space<vmem>> -> memref<2x64xf32, #tpu.memory_space<vmem>>
      %c0_i32_14 = arith.constant 0 : i32
      %c0_i32_15 = arith.constant 0 : i32
      %25 = tpu.memref_slice %arg2[%c0_i32_14, %c0_i32_15] : memref<2x64xf32, #tpu.memory_space<any>> -> memref<2x64xf32, #tpu.memory_space<any>>
      %26 = tpu.memref_slice %arg4[%c0_i32_11] : memref<1x!tpu.dma_semaphore, #tpu.memory_space<semaphore_mem>> -> memref<1x!tpu.dma_semaphore, #tpu.memory_space<semaphore_mem>>
      %27 = tpu.memref_squeeze %26 : memref<1x!tpu.dma_semaphore, #tpu.memory_space<semaphore_mem>> -> memref<!tpu.dma_semaphore, #tpu.memory_space<semaphore_mem>>
      tpu.wait_dma2 semaphore(%27 : memref<!tpu.dma_semaphore, #tpu.memory_space<semaphore_mem>>) src(%24 : memref<2x64xf32, #tpu.memory_space<vmem>>) dst(%25 : memref<2x64xf32, #tpu.memory_space<any>>)
    } else {
    }
    return
  }
  func.func @transform_0(%arg0: i32) -> (i32, i32) {
    %c0_i32 = arith.constant 0 : i32
    %c0_i32_0 = arith.constant 0 : i32
    %c0_i32_1 = arith.constant 0 : i32
    return %c0_i32, %c0_i32_0 : i32, i32
  }
}

</mosaic_0001>

<llo_original>
// kernel: tpu_custom_call.1
$region0: #{tpu_custom_call.1}
  #allocation0 [shape = 'u32[]', space=smem, size = 0x4, offset = 0x4, fixed_abs, tag = 'smem constant byte address 0x4 - core index']
  #allocation1 [shape = 'u32[144,128]{1,0:T(1,128)}', space=vmem, size = 0x12000, scoped, tag = 'internal scratch']
  #allocation2 [shape = 'f32[2,64]{1,0:T(2,128)}', space=vmem, size = 0x400, scoped, tag = 'scratch operand']
  #allocation3 [shape = 's32[1]{0}', space=sflag, size = 0x4, scoped, tag = 'scratch operand']
  #allocation6 [shape = 's32[]', space=sflag, size = 0x4, offset = 0, fixed_abs, tag = 'sflag constant byte address 0x0 - dummy sync flag']
  #allocation7 [shape = 's32[]', space=sflag, size = 0x4, offset = 0, fixed_abs, tag = 'sflag constant byte address 0x0 - dummy sync flag']
  #allocation8 [shape = 'u32[]', space=smem, size = 0x4, offset = 0x44, fixed_abs, tag = 'smem constant byte address 0x44 - assertion arg 0']
  #allocation9 [shape = 'u32[]', space=smem, size = 0x4, offset = 0x48, fixed_abs, tag = 'smem constant byte address 0x48 - assertion arg 1']
  %s0 = inlined_call_operand.hbm [shape: f32[1,64], index: 0, kind: input, shape index: {}]
  %s1 = inlined_call_operand.hbm [shape: f32[2,64], index: 1, kind: output, shape index: {}]
  %s2 = sld [smem:[#allocation0]]
  $region26: #{tpu_custom_call.1} parent=0
    _
  %s4 = ssub.s32 1, %s2
  %s5 = scalar_select 0, %s4, %s2
  $region1: #{tpu_custom_call.1} parent=0
    #allocation4 [shape = 'u8[512]{0}', space=vmem, size = 0x400, scoped, tag = 'input window, operand 0, single buffered']
    #allocation5 [shape = 's32[1]{0}', space=sflag, size = 0x4, scoped, tag = 'scoped memory for tpu_custom_call.1']
    %6 = vsyncpa [#allocation5], 0
    // Predicated region
    $region2: #{tpu_custom_call.1} parent=1 // pred_check
      _
    $region3: #{tpu_custom_call.1} parent=1 // pred_check_branch
      %8 = sbr.rel (0) target = $region5
    $region4: #{tpu_custom_call.1} parent=1 // pred_region
      %s10 = ssub.s32 16, 16
      %11 = vsyncadd [#allocation5], %s10
      %s13 = sshll.u32 [#allocation4], 4
      %s14 = int_to_ptr.vmem [resolvable:$true] %s13
      %16 = dma.hbm_to_vmem [thread:$0]  %s0, 16, %s14, [#allocation5]
    $region5: #{tpu_custom_call.1} parent=1 // pred_fallthru
      _
    // Predicated region
    $region6: #{tpu_custom_call.1} parent=1 // pred_check
      _
    $region7: #{tpu_custom_call.1} parent=1 // pred_check_branch
      %18 = sbr.rel (0) target = $region9
    $region8: #{tpu_custom_call.1} parent=1 // pred_region
      %19 = dma.done [#allocation5], 16
    $region9: #{tpu_custom_call.1} parent=1 // pred_fallthru
      _
    %p20 = scmp.eq.s32.totalorder 0, 0
    // Predicated region
    $region10: #{tpu_custom_call.1} parent=1 // pred_check
      %p21 = pneg %p20
    $region11: #{tpu_custom_call.1} parent=1 // pred_check_branch
      %23 = sbr.rel (%p21) target = $region13
    $region12: #{tpu_custom_call.1} parent=1 // pred_region
      %v24 = vld [vmem:[#allocation4] sm:$0x1]
      %v26 = vlaneseq
      %v27 = vshrl.u32 %v26, 7
      %v28 = vsub.s32 0, %v27
      %v29 = vrot.slane %v24, %v28
      %vm31 = vcmask 517120
      %32 = vst.msk [vmem:[#allocation2] sm:$0x3] %vm31, %v29
    $region13: #{tpu_custom_call.1} parent=1 // pred_fallthru
      _
    %p33 = scmp.ge.s32.totalorder 0, 1
    // Predicated region
    $region14: #{tpu_custom_call.1} parent=1 // pred_check
      %p34 = pneg %p33
    $region15: #{tpu_custom_call.1} parent=1 // pred_check_branch
      %36 = sbr.rel (%p34) target = $region17
    $region16: #{tpu_custom_call.1} parent=1 // pred_region
      %s37 = smul.u32 2, 1
      %s38 = sshll.u32 %s37, 4
      %39 = dma.done [#allocation3], %s38
    $region17: #{tpu_custom_call.1} parent=1 // pred_fallthru
      _
    %s40 = smul.u32 0, 2
    %s41 = smul.addr %s40, 16
    %s42 = scalar_lea.hbm %s1, %s41
    // Predicated region
    $region18: #{tpu_custom_call.1} parent=1 // pred_check
      _
    $region19: #{tpu_custom_call.1} parent=1 // pred_check_branch
      %44 = sbr.rel target = $region21
    $region20: #{tpu_custom_call.1} parent=1 // pred_region
      %45 = sst [smem:[#allocation8]] [#allocation7]
      %46 = sst [smem:[#allocation9]] [#allocation6]
    $region21: #{tpu_custom_call.1} parent=1 // pred_fallthru
      _
    %48 = shalt.err (0)
    %s50 = sshll.u32 [#allocation2], 4
    %s51 = int_to_ptr.vmem [resolvable:$true] %s50
    %53 = dma.vmem_to_hbm [thread:$0]  %s51, 32, %s42, [#allocation3]
    // Predicated region
    $region22: #{tpu_custom_call.1} parent=1 // pred_check
      %p54 = pneg %p20
    $region23: #{tpu_custom_call.1} parent=1 // pred_check_branch
      %56 = sbr.rel (%p54) target = $region25
    $region24: #{tpu_custom_call.1} parent=1 // pred_region
      %s57 = smul.u32 2, 1
      %s58 = sshll.u32 %s57, 4
      %59 = dma.done [#allocation3], %s58
    $region25: #{tpu_custom_call.1} parent=1 // pred_fallthru
      _
    %60 = vsyncpa [#allocation5], 1
  %61 = vsyncmov [#allocation3]
  %s62 = vpop.sfrf %61
  %p63 = scmp.eq.s32.totalorder %s62, 0
  %p64 = pneg %p63
  %66 = shalt.err (%p64)

</llo_original>
